<compile_context>
chip_gen: v5e
topology: v5e:2x2
jax: 0.10.0
libtpu: 0.0.40
codegen_flags: <defaults>
</compile_context>

<pallas_src>
import math
import functools
import numpy as np
import jax
import jax.numpy as jnp
from jax.experimental import pallas as pl
from jax.experimental.pallas import tpu as pltpu


def _fourier_kernel(x_ref, fp_ref, o_ref, *, total_gain):
    # x_ref:  (TB, 1)  input dtype   (batch on the sublane axis)
    # fp_ref: (2, D)   float32       (row 0 = freqs, row 1 = phases; resident)
    # o_ref:  (TB, D)  output dtype
    x = x_ref[...].astype(jnp.float32)          # (TB, 1)
    f = fp_ref[0:1, :]                          # (1, D)
    p = fp_ref[1:2, :]                          # (1, D)
    y = jnp.cos(x * f + p)                      # broadcasted outer product + phase
    if total_gain != 1.0:                       # Python-known: skip VALU mul when 1.0
        y = y * total_gain
    o_ref[...] = y.astype(o_ref.dtype)


def _is_multicore_tc():
    """True only on parts whose grid 'parallel' axes shard across >1 TensorCore (v7x)."""
    try:
        kind = jax.devices()[0].device_kind.lower()
    except Exception:
        return False
    return "v7" in kind


def _choose_tile_b(B, D, out_itemsize, multi_core):
    """Batch tile: ~4 MiB output blocks in out_dtype, multiple of 8, VMEM-safe everywhere."""
    if B < 8:
        return B                                    # block == full batch dim (valid layout)
    row_bytes = D * out_itemsize
    target = max(8, (4 << 20) // row_bytes)         # ~4 MiB output tile
    tb = min((target // 8) * 8, (B // 8) * 8)
    if multi_core:
        # Keep >= 4 grid steps (>= 2 double-buffered blocks per TensorCore) when B allows.
        quarter = ((B // 4) // 8) * 8
        if quarter >= 8:
            tb = min(tb, quarter)
    return max(8, tb)


def fourier_features(x, freqs, phases, *, gain_const=1.0, gain=1.0, tile_b=None):
    """x: [B] (any float dtype). freqs, phases: [D] float32. Returns [B, D] in x.dtype."""
    B = x.shape[0]
    D = freqs.shape[0]
    out_dtype = x.dtype
    total_gain = float(gain_const) * float(gain)

    # Lane-dense feature axis: pad D up to a multiple of 128 only if needed so the
    # output store is full-width vst. D=256 (module default) takes the no-pad path.
    Dp = ((D + 127) // 128) * 128
    f32 = freqs.astype(jnp.float32)
    p32 = phases.astype(jnp.float32)
    if Dp != D:
        f32 = jnp.pad(f32, (0, Dp - D))
        p32 = jnp.pad(p32, (0, Dp - D))
    fp = jnp.stack([f32, p32], axis=0)              # (2, Dp): single resident block

    out_itemsize = np.dtype(out_dtype).itemsize
    if tile_b is None:
        tile_b = _choose_tile_b(B, Dp, out_itemsize, _is_multicore_tc())
    else:
        tile_b = int(tile_b)
        if tile_b >= 8:
            tile_b = max(8, (tile_b // 8) * 8)
        tile_b = min(tile_b, B)

    x2 = x.reshape(B, 1)

    kernel = functools.partial(_fourier_kernel, total_gain=total_gain)

    cost = pl.CostEstimate(
        flops=3 * B * Dp,                 # mul + add (+ optional gain mul)
        transcendentals=B * Dp,           # cos
        bytes_accessed=B * Dp * out_itemsize + B * np.dtype(x.dtype).itemsize + 2 * Dp * 4,
    )

    grid = (pl.cdiv(B, tile_b),)          # partial last block handled by masked DMA
    out = pl.pallas_call(
        kernel,
        out_shape=jax.ShapeDtypeStruct((B, Dp), out_dtype),
        grid_spec=pltpu.PrefetchScalarGridSpec(
            num_scalar_prefetch=0,
            grid=grid,
            in_specs=[
                pl.BlockSpec((tile_b, 1), lambda i: (i, 0)),   # batch tile
                pl.BlockSpec((2, Dp), lambda i: (0, 0)),       # freqs+phases: fetched once
            ],
            out_specs=pl.BlockSpec((tile_b, Dp), lambda i: (i, 0)),
        ),
        compiler_params=pltpu.CompilerParams(
            dimension_semantics=("parallel",),
            vmem_limit_bytes=32 << 20,    # covers v5e's 16 MiB default scoped limit
        ),
        cost_estimate=cost,
    )(x2, fp)
    return out if Dp == D else out[:, :D]


def fourier_features_ref(x, freqs, phases, *, gain_const=1.0, gain=1.0):
    xf = x.astype(jnp.float32)
    y = jnp.cos(xf[:, None] * freqs[None, :].astype(jnp.float32)
                + phases[None, :].astype(jnp.float32))
    return (y * (gain_const * gain)).astype(x.dtype)


if __name__ == "__main__":
    # Module config (synthetic, deterministic init — no checkpoint loading).
    num_channels = 256
    bandwidth = 0.5
    normalize_flag = True
    gain_const = math.sqrt(2.0) if normalize_flag else 1.0

    key = jax.random.PRNGKey(0)
    k_f, k_p, k_x1, k_x2, k_x3 = jax.random.split(key, 5)

    # Buffers: freqs = 2*pi*bandwidth*randn(D), phases = 2*pi*rand(D)
    freqs = 2.0 * np.pi * bandwidth * jax.random.normal(k_f, (num_channels,), jnp.float32)
    phases = 2.0 * np.pi * jax.random.uniform(k_p, (num_channels,), jnp.float32)

    # Case 1: aligned batch, f32, gain != 1.
    B = 8
    x = jax.random.normal(k_x1, (B,), jnp.float32)
    out = jax.block_until_ready(
        fourier_features(x, freqs, phases, gain_const=gain_const, gain=1.0))
    ref = fourier_features_ref(x, freqs, phases, gain_const=gain_const, gain=1.0)
    np.testing.assert_allclose(np.asarray(out), np.asarray(ref), rtol=1e-5, atol=1e-5)
    assert out.shape == (B, num_channels) and out.dtype == x.dtype

    # Case 2: ragged batch (partial last block, no wrapper padding), bf16, gain == 1.
    B2 = 10
    x2 = jax.random.normal(k_x2, (B2,), jnp.float32).astype(jnp.bfloat16)
    out2 = jax.block_until_ready(
        fourier_features(x2, freqs, phases, gain_const=1.0, gain=1.0, tile_b=8))
    ref2 = fourier_features_ref(x2, freqs, phases, gain_const=1.0, gain=1.0)
    np.testing.assert_allclose(np.asarray(out2, dtype=np.float32),
                               np.asarray(ref2, dtype=np.float32),
                               rtol=2e-2, atol=2e-2)
    assert out2.shape == (B2, num_channels) and out2.dtype == jnp.bfloat16

    # Case 3: tiny batch < 8 (block == full batch dim path), f32.
    B3 = 5
    x3 = jax.random.normal(k_x3, (B3,), jnp.float32)
    out3 = jax.block_until_ready(
        fourier_features(x3, freqs, phases, gain_const=gain_const, gain=2.0))
    ref3 = fourier_features_ref(x3, freqs, phases, gain_const=gain_const, gain=2.0)
    np.testing.assert_allclose(np.asarray(out3), np.asarray(ref3), rtol=1e-5, atol=1e-5)
    assert out3.shape == (B3, num_channels) and out3.dtype == x3.dtype

    print("KERNEL_OK")
</pallas_src>

<mosaic_0001>
module attributes {stable_mosaic.version = 11 : i64} {
  func.func @_fourier_kernel(%arg0: i32, %arg1: memref<8x1xf32, #tpu.memory_space<vmem>>, %arg2: memref<2x256xf32, #tpu.memory_space<vmem>>, %arg3: memref<8x256xf32, #tpu.memory_space<vmem>>) attributes {dimension_semantics = [#tpu.dimension_semantics<parallel>], iteration_bounds = array<i64: 1>, scalar_prefetch = 0 : i64, scratch_operands = 0 : i64, tpu.core_type = #tpu.core_type<tc>, window_params = [{transform_indices = @transform_0, window_bounds = array<i64: 8, 1>}, {pipeline_mode = #tpu.pipeline_mode<synchronous>, transform_indices = @transform_1, window_bounds = array<i64: 2, 256>}, {transform_indices = @transform_2, window_bounds = array<i64: 8, 256>}]} {
    %c0 = arith.constant 0 : index
    %c0_0 = arith.constant 0 : index
    %0 = vector.load %arg1[%c0, %c0_0] : memref<8x1xf32, #tpu.memory_space<vmem>>, vector<8x1xf32>
    %c0_1 = arith.constant 0 : index
    %c0_2 = arith.constant 0 : index
    %1 = vector.load %arg2[%c0_1, %c0_2] : memref<2x256xf32, #tpu.memory_space<vmem>>, vector<1x256xf32>
    %c1 = arith.constant 1 : index
    %c0_3 = arith.constant 0 : index
    %2 = vector.load %arg2[%c1, %c0_3] : memref<2x256xf32, #tpu.memory_space<vmem>>, vector<1x256xf32>
    %3 = vector.broadcast %0 : vector<8x1xf32> to vector<8x256xf32>
    %4 = vector.broadcast %1 : vector<1x256xf32> to vector<8x256xf32>
    %5 = arith.mulf %3, %4 : vector<8x256xf32>
    %6 = vector.broadcast %2 : vector<1x256xf32> to vector<8x256xf32>
    %7 = arith.addf %5, %6 : vector<8x256xf32>
    %8 = math.cos %7 : vector<8x256xf32>
    %cst = arith.constant 1.41421354 : f32
    %9 = vector.broadcast %cst : f32 to vector<8x256xf32>
    %10 = arith.mulf %8, %9 : vector<8x256xf32>
    %c0_4 = arith.constant 0 : index
    %c0_5 = arith.constant 0 : index
    %11 = vector.load %arg3[%c0_4, %c0_5] : memref<8x256xf32, #tpu.memory_space<vmem>>, vector<8x256xf32>
    tpu.vector_store %arg3[%c0_4, %c0_5], %10 {strides = array<i32>} : memref<8x256xf32, #tpu.memory_space<vmem>>, vector<8x256xf32>,
    return
  }
  func.func @transform_0(%arg0: i32) -> (i32, i32) {
    %c0_i32 = arith.constant 0 : i32
    %c0_i32_0 = arith.constant 0 : i32
    return %arg0, %c0_i32 : i32, i32
  }
  func.func @transform_1(%arg0: i32) -> (i32, i32) {
    %c0_i32 = arith.constant 0 : i32
    %c0_i32_0 = arith.constant 0 : i32
    %c0_i32_1 = arith.constant 0 : i32
    return %c0_i32, %c0_i32_0 : i32, i32
  }
  func.func @transform_2(%arg0: i32) -> (i32, i32) {
    %c0_i32 = arith.constant 0 : i32
    %c0_i32_0 = arith.constant 0 : i32
    return %arg0, %c0_i32 : i32, i32
  }
}

</mosaic_0001>

<llo_original>
// kernel: tpu_custom_call.1
$region0: #{tpu_custom_call.1}
  #allocation0 [shape = 'u32[]', space=smem, size = 0x4, offset = 0x4, fixed_abs, tag = 'smem constant byte address 0x4 - core index']
  #allocation1 [shape = 'u32[72,128]{1,0:T(1,128)}', space=vmem, size = 0x9000, scoped, tag = 'internal scratch']
  %s0 = inlined_call_operand.vmem [shape: f32[8,1], index: 0, kind: input, shape index: {}]
  %s1 = inlined_call_operand.vmem [shape: f32[2,256], index: 1, kind: input, shape index: {}]
  %s2 = inlined_call_operand.hbm [shape: f32[8,256], index: 2, kind: output, shape index: {}]
  %s3 = sld [smem:[#allocation0]]
  $region18: #{tpu_custom_call.1} parent=0
    _
  %s5 = ssub.s32 1, %s3
  %s6 = scalar_select 0, %s5, %s3
  $region1: #{tpu_custom_call.1} parent=0
    #allocation2 [shape = 'u8[8192]{0}', space=vmem, size = 0x2000, scoped, tag = 'output window, operand 0, single buffered']
    #allocation3 [shape = 's32[1]{0}', space=sflag, size = 0x4, scoped, tag = 'scoped memory for tpu_custom_call.1']
    %7 = vsyncpa [#allocation3], 0
    // Predicated region
    $region2: #{tpu_custom_call.1} parent=1 // pred_check
      _
    $region3: #{tpu_custom_call.1} parent=1 // pred_check_branch
      %9 = sbr.rel (0) target = $region5
    $region4: #{tpu_custom_call.1} parent=1 // pred_region
      _
    $region5: #{tpu_custom_call.1} parent=1 // pred_fallthru
      _
    // Predicated region
    $region6: #{tpu_custom_call.1} parent=1 // pred_check
      _
    $region7: #{tpu_custom_call.1} parent=1 // pred_check_branch
      %11 = sbr.rel (0) target = $region9
    $region8: #{tpu_custom_call.1} parent=1 // pred_region
      _
    $region9: #{tpu_custom_call.1} parent=1 // pred_fallthru
      _
    %v12 = vld [vmem:[%s0] sm:$0xff]
    %v13 = vld [vmem:[%s1] ss:$2 sm:$0x3]
    %s14 = scalar_lea.vmem %s1, 1
    %v15 = vld [vmem:[%s14] ss:$2 sm:$0x3]
    %17 = vset.pattern.permute.xlu0 0
    %18 = vperm.xlu0 %17, %v12
    %v19 = vpop.permute.xlu0 %18
    %v22 = vperm.slane %v13, 0
    %v23 = vperm.slane %v13, 1
    %v26 = vmul.f32 %v19, %v22
    %v27 = vmul.f32 %v19, %v23
    %v29 = vperm.slane %v15, 0
    %v30 = vperm.slane %v15, 1
    %v33 = vadd.f32 %v26, %v29
    %v34 = vadd.f32 %v27, %v30
    %v35 = vand.u32 2147483647, %v33
    %vm36 = vcmp.le.f32.partialorder %v35, 0.7853982
    %vm37 = vcmp.lt.s32.totalorder %v33, 0
    %v38 = vand.u32 %v33, 2139095040
    %v39 = vshrl.u32 %v38, 23
    %v40 = vsub.s32 %v39, 127
    %v41 = vand.u32 2147483647, %v33
    %v42 = vand.u32 %v41, 8388607
    %v43 = vor.u32 %v42, 8388608
    %v44 = vsub.s32 0, %v43
    %v45 = vadd.s32 %v40, 1
    %vm46 = vcmp.gt.s32.totalorder %v45, 0
    %v47 = vsel %vm46, %v45, 0
    %v48 = vshrl.u32 %v47, 5
    %v49 = vand.u32 %v47, 31
    %v50 = vsub.s32 32, %v49
    %v51 = vshrl.u32 683565275, %v50
    %v52 = vshll.u32 683565275, %v49
    %v53 = vshrl.u32 2475754826, %v50
    %v54 = vor.u32 %v52, %v53
    %v55 = vshll.u32 2475754826, %v49
    %v56 = vshrl.u32 2131351028, %v50
    %v57 = vor.u32 %v55, %v56
    %v58 = vshll.u32 2131351028, %v49
    %v59 = vshrl.u32 2102212464, %v50
    %v60 = vor.u32 %v58, %v59
    %v61 = vshll.u32 2102212464, %v49
    %v62 = vshrl.u32 920167782, %v50
    %v63 = vor.u32 %v61, %v62
    %v64 = vshll.u32 920167782, %v49
    %v65 = vshrl.u32 1326507024, %v50
    %v66 = vor.u32 %v64, %v65
    %vm67 = vcmp.lt.s32.totalorder %v48, 1
    %vm68 = vcmp.lt.s32.totalorder %v48, 2
    %vm69 = vcmp.lt.s32.totalorder %v48, 3
    %vm70 = vcmp.lt.s32.totalorder %v48, 4
    %v71 = vsel %vm67, %v51, %v54
    %v72 = vsel %vm70, %v60, 2102212464
    %v73 = vsel %vm69, %v57, %v72
    %v74 = vsel %vm68, %v71, %v73
    %v75 = vsel %vm67, %v54, %v57
    %v76 = vsel %vm70, %v63, 920167782
    %v77 = vsel %vm69, %v60, %v76
    %v78 = vsel %vm68, %v75, %v77
    %v79 = vsel %vm67, %v57, %v60
    %v80 = vsel %vm70, %v66, 1326507024
    %v81 = vsel %vm69, %v63, %v80
    %v82 = vsel %vm68, %v79, %v81
    %v83 = vshll.u32 %v43, 8
    %v84 = vand.u32 %v83, 65535
    %v85 = vshrl.u32 %v83, 16
    %v86 = vand.u32 %v82, 65535
    %v87 = vshrl.u32 %v82, 16
    %v88 = vmul.u32 %v84, %v86
    %v89 = vmul.u32 %v84, %v87
    %v90 = vmul.u32 %v85, %v86
    %v91 = vmul.u32 %v85, %v87
    %v92 = vshll.u32 %v89, 16
    %v93 = vshrl.u32 %v89, 16
    %v94 = vshll.u32 %v90, 16
    %v95 = vshrl.u32 %v90, 16
    %vm96 = vc.u32 %v88, %v92
    %v97 = vsel %vm96, 1, 0
    %v98 = vadd.s32 %v88, %v92
    %v99 = vadd.s32 %v91, %v97
    %vm100 = vc.u32 %v98, %v94
    %v101 = vsel %vm100, 1, 0
    %v102 = vadd.s32 %v98, %v94
    %v103 = vadd.s32 %v99, %v101
    %v104 = vadd.s32 %v103, %v93
    %v105 = vadd.s32 %v104, %v95
    %v106 = vand.u32 %v83, 65535
    %v107 = vshrl.u32 %v83, 16
    %v108 = vand.u32 %v78, 65535
    %v109 = vshrl.u32 %v78, 16
    %v110 = vmul.u32 %v106, %v108
    %v111 = vmul.u32 %v106, %v109
    %v112 = vmul.u32 %v107, %v108
    %v113 = vmul.u32 %v107, %v109
    %v114 = vshll.u32 %v111, 16
    %v115 = vshrl.u32 %v111, 16
    %v116 = vshll.u32 %v112, 16
    %v117 = vshrl.u32 %v112, 16
    %vm118 = vc.u32 %v110, %v114
    %v119 = vsel %vm118, 1, 0
    %v120 = vadd.s32 %v110, %v114
    %v121 = vadd.s32 %v113, %v119
    %vm122 = vc.u32 %v120, %v116
    %v123 = vsel %vm122, 1, 0
    %v124 = vadd.s32 %v120, %v116
    %v125 = vadd.s32 %v121, %v123
    %v126 = vadd.s32 %v125, %v115
    %v127 = vadd.s32 %v126, %v117
    %v128 = vmul.u32 %v83, %v74
    %v129 = vadd.s32 %v105, %v124
    %vm130 = vc.u32 %v105, %v124
    %v131 = vadd.s32 %v127, 1
    %v132 = vsel %vm130, %v131, %v127
    %v133 = vadd.s32 %v128, %v132
    %v134 = vadd.s32 %v133, 536870912
    %v135 = vshrl.u32 %v134, 30
    %v136 = vshll.u32 %v135, 30
    %v137 = vsub.s32 %v133, %v136
    %vm138 = vcmp.lt.s32.totalorder %v137, 0
    %v139 = vsub.s32 0, %v137
    %v140 = vsel %vm138, %v139, %v137
    %v141 = vclz %v140
    %v142 = vsub.s32 %v141, 2
    %vm143 = vcmp.gt.s32.totalorder 0, %v142
    %v144 = vsel %vm143, 0, %v142
    %v145 = vsub.s32 32, %v144
    %v146 = vshll.u32 %v137, %v144
    %v147 = vshrl.u32 %v129, %v145
    %v148 = vor.u32 %v146, %v147
    %v149 = vsub.s32 4294967266, %v144
    %v150 = vadd.s32 %v149, 127
    %v151 = vshll.u32 %v150, 23
    %v152 = vor.u32 4788187, %v151
    %v153 = vand.u32 2147483647, %v152
    %v155 = vcvt.s32.f32 %v148
    %v156 = vmul.f32 %v155, %v153
    %v157 = vxor.u32 %v156, 2147483648
    %v158 = vsel %vm37, %v157, %v156
    %v159 = vsub.s32 4, %v135
    %v160 = vsel %vm37, %v159, %v135
    %v161 = vsel %vm36, %v33, %v158
    %v162 = vsel %vm36, 0, %v160
    %v163 = vmul.f32 %v161, %v161
    %v164 = vmul.f32 %v163, -0.001358992
    %v165 = vadd.f32 %v164, 0.041655596
    %v166 = vmul.f32 %v163, %v165
    %v167 = vadd.f32 %v166, -0.4999988
    %v168 = vmul.f32 %v163, %v167
    %v169 = vadd.f32 1.0, %v168
    %v170 = vmul.f32 %v161, %v161
    %v171 = vmul.f32 %v170, -0.00019511016
    %v172 = vadd.f32 %v171, 0.008332121
    %v173 = vmul.f32 %v170, %v172
    %v174 = vadd.f32 %v173, -0.16666654
    %v175 = vmul.f32 %v170, %v174
    %v176 = vadd.f32 %v175, 1.0
    %v177 = vmul.f32 %v176, %v161
    %vm178 = vweird.f32 %v33
    %v179 = vand.u32 %v162, 3
    %vm180 = vcmp.lt.s32.totalorder %v179, 2
    %vm181 = vcmp.eq.s32.totalorder %v179, 0
    %v182 = vxor.u32 %v177, 2147483648
    %v183 = vsel %vm181, %v169, %v182
    %vm184 = vcmp.eq.s32.totalorder %v179, 2
    %v185 = vxor.u32 %v169, 2147483648
    %v186 = vsel %vm184, %v185, %v177
    %v187 = vsel %vm180, %v183, %v186
    %v188 = vsel %vm178, nan, %v187
    %v189 = vand.u32 2147483647, %v34
    %vm190 = vcmp.le.f32.partialorder %v189, 0.7853982
    %vm191 = vcmp.lt.s32.totalorder %v34, 0
    %v192 = vand.u32 %v34, 2139095040
    %v193 = vshrl.u32 %v192, 23
    %v194 = vsub.s32 %v193, 127
    %v195 = vand.u32 2147483647, %v34
    %v196 = vand.u32 %v195, 8388607
    %v197 = vor.u32 %v196, 8388608
    %v198 = vsub.s32 0, %v197
    %v199 = vadd.s32 %v194, 1
    %vm200 = vcmp.gt.s32.totalorder %v199, 0
    %v201 = vsel %vm200, %v199, 0
    %v202 = vshrl.u32 %v201, 5
    %v203 = vand.u32 %v201, 31
    %v204 = vsub.s32 32, %v203
    %v205 = vshrl.u32 683565275, %v204
    %v206 = vshll.u32 683565275, %v203
    %v207 = vshrl.u32 2475754826, %v204
    %v208 = vor.u32 %v206, %v207
    %v209 = vshll.u32 2475754826, %v203
    %v210 = vshrl.u32 2131351028, %v204
    %v211 = vor.u32 %v209, %v210
    %v212 = vshll.u32 2131351028, %v203
    %v213 = vshrl.u32 2102212464, %v204
    %v214 = vor.u32 %v212, %v213
    %v215 = vshll.u32 2102212464, %v203
    %v216 = vshrl.u32 920167782, %v204
    %v217 = vor.u32 %v215, %v216
    %v218 = vshll.u32 920167782, %v203
    %v219 = vshrl.u32 1326507024, %v204
    %v220 = vor.u32 %v218, %v219
    %vm221 = vcmp.lt.s32.totalorder %v202, 1
    %vm222 = vcmp.lt.s32.totalorder %v202, 2
    %vm223 = vcmp.lt.s32.totalorder %v202, 3
    %vm224 = vcmp.lt.s32.totalorder %v202, 4
    %v225 = vsel %vm221, %v205, %v208
    %v226 = vsel %vm224, %v214, 2102212464
    %v227 = vsel %vm223, %v211, %v226
    %v228 = vsel %vm222, %v225, %v227
    %v229 = vsel %vm221, %v208, %v211
    %v230 = vsel %vm224, %v217, 920167782
    %v231 = vsel %vm223, %v214, %v230
    %v232 = vsel %vm222, %v229, %v231
    %v233 = vsel %vm221, %v211, %v214
    %v234 = vsel %vm224, %v220, 1326507024
    %v235 = vsel %vm223, %v217, %v234
    %v236 = vsel %vm222, %v233, %v235
    %v237 = vshll.u32 %v197, 8
    %v238 = vand.u32 %v237, 65535
    %v239 = vshrl.u32 %v237, 16
    %v240 = vand.u32 %v236, 65535
    %v241 = vshrl.u32 %v236, 16
    %v242 = vmul.u32 %v238, %v240
    %v243 = vmul.u32 %v238, %v241
    %v244 = vmul.u32 %v239, %v240
    %v245 = vmul.u32 %v239, %v241
    %v246 = vshll.u32 %v243, 16
    %v247 = vshrl.u32 %v243, 16
    %v248 = vshll.u32 %v244, 16
    %v249 = vshrl.u32 %v244, 16
    %vm250 = vc.u32 %v242, %v246
    %v251 = vsel %vm250, 1, 0
    %v252 = vadd.s32 %v242, %v246
    %v253 = vadd.s32 %v245, %v251
    %vm254 = vc.u32 %v252, %v248
    %v255 = vsel %vm254, 1, 0
    %v256 = vadd.s32 %v252, %v248
    %v257 = vadd.s32 %v253, %v255
    %v258 = vadd.s32 %v257, %v247
    %v259 = vadd.s32 %v258, %v249
    %v260 = vand.u32 %v237, 65535
    %v261 = vshrl.u32 %v237, 16
    %v262 = vand.u32 %v232, 65535
    %v263 = vshrl.u32 %v232, 16
    %v264 = vmul.u32 %v260, %v262
    %v265 = vmul.u32 %v260, %v263
    %v266 = vmul.u32 %v261, %v262
    %v267 = vmul.u32 %v261, %v263
    %v268 = vshll.u32 %v265, 16
    %v269 = vshrl.u32 %v265, 16
    %v270 = vshll.u32 %v266, 16
    %v271 = vshrl.u32 %v266, 16
    %vm272 = vc.u32 %v264, %v268
    %v273 = vsel %vm272, 1, 0
    %v274 = vadd.s32 %v264, %v268
    %v275 = vadd.s32 %v267, %v273
    %vm276 = vc.u32 %v274, %v270
    %v277 = vsel %vm276, 1, 0
    %v278 = vadd.s32 %v274, %v270
    %v279 = vadd.s32 %v275, %v277
    %v280 = vadd.s32 %v279, %v269
    %v281 = vadd.s32 %v280, %v271
    %v282 = vmul.u32 %v237, %v228
    %v283 = vadd.s32 %v259, %v278
    %vm284 = vc.u32 %v259, %v278
    %v285 = vadd.s32 %v281, 1
    %v286 = vsel %vm284, %v285, %v281
    %v287 = vadd.s32 %v282, %v286
    %v288 = vadd.s32 %v287, 536870912
    %v289 = vshrl.u32 %v288, 30
    %v290 = vshll.u32 %v289, 30
    %v291 = vsub.s32 %v287, %v290
    %vm292 = vcmp.lt.s32.totalorder %v291, 0
    %v293 = vsub.s32 0, %v291
    %v294 = vsel %vm292, %v293, %v291
    %v295 = vclz %v294
    %v296 = vsub.s32 %v295, 2
    %vm297 = vcmp.gt.s32.totalorder 0, %v296
    %v298 = vsel %vm297, 0, %v296
    %v299 = vsub.s32 32, %v298
    %v300 = vshll.u32 %v291, %v298
    %v301 = vshrl.u32 %v283, %v299
    %v302 = vor.u32 %v300, %v301
    %v303 = vsub.s32 4294967266, %v298
    %v304 = vadd.s32 %v303, 127
    %v305 = vshll.u32 %v304, 23
    %v306 = vor.u32 4788187, %v305
    %v307 = vand.u32 2147483647, %v306
    %v309 = vcvt.s32.f32 %v302
    %v310 = vmul.f32 %v309, %v307
    %v311 = vxor.u32 %v310, 2147483648
    %v312 = vsel %vm191, %v311, %v310
    %v313 = vsub.s32 4, %v289
    %v314 = vsel %vm191, %v313, %v289
    %v315 = vsel %vm190, %v34, %v312
    %v316 = vsel %vm190, 0, %v314
    %v317 = vmul.f32 %v315, %v315
    %v318 = vmul.f32 %v317, -0.001358992
    %v319 = vadd.f32 %v318, 0.041655596
    %v320 = vmul.f32 %v317, %v319
    %v321 = vadd.f32 %v320, -0.4999988
    %v322 = vmul.f32 %v317, %v321
    %v323 = vadd.f32 1.0, %v322
    %v324 = vmul.f32 %v315, %v315
    %v325 = vmul.f32 %v324, -0.00019511016
    %v326 = vadd.f32 %v325, 0.008332121
    %v327 = vmul.f32 %v324, %v326
    %v328 = vadd.f32 %v327, -0.16666654
    %v329 = vmul.f32 %v324, %v328
    %v330 = vadd.f32 %v329, 1.0
    %v331 = vmul.f32 %v330, %v315
    %vm332 = vweird.f32 %v34
    %v333 = vand.u32 %v316, 3
    %vm334 = vcmp.lt.s32.totalorder %v333, 2
    %vm335 = vcmp.eq.s32.totalorder %v333, 0
    %v336 = vxor.u32 %v331, 2147483648
    %v337 = vsel %vm335, %v323, %v336
    %vm338 = vcmp.eq.s32.totalorder %v333, 2
    %v339 = vxor.u32 %v323, 2147483648
    %v340 = vsel %vm338, %v339, %v331
    %v341 = vsel %vm334, %v337, %v340
    %v342 = vsel %vm332, nan, %v341
    %v343 = vmul.f32 %v188, 1.4142135
    %v344 = vmul.f32 %v342, 1.4142135
    %345 = vst [vmem:[#allocation2] sm:$0xff] %v343
    %346 = vst [vmem:[#allocation2 + $0x8] sm:$0xff] %v344
    // Predicated region
    $region10: #{tpu_custom_call.1} parent=1 // pred_check
      _
    $region11: #{tpu_custom_call.1} parent=1 // pred_check_branch
      %348 = sbr.rel (0) target = $region13
    $region12: #{tpu_custom_call.1} parent=1 // pred_region
      %350 = vsyncadd [#allocation3], 0
      %s352 = sshll.u32 [#allocation2], 4
      %s353 = int_to_ptr.vmem [resolvable:$true] %s352
      %s354 = sshll.u32 %s2, 4
      %s355 = int_to_ptr.hbm [resolvable:$true] %s354
      %357 = dma.vmem_to_hbm [thread:$0]  %s353, 256, %s355, [#allocation3]
    $region13: #{tpu_custom_call.1} parent=1 // pred_fallthru
      _
    // Predicated region
    $region14: #{tpu_custom_call.1} parent=1 // pred_check
      _
    $region15: #{tpu_custom_call.1} parent=1 // pred_check_branch
      %359 = sbr.rel (0) target = $region17
    $region16: #{tpu_custom_call.1} parent=1 // pred_region
      %361 = dma.done [#allocation3], 256
    $region17: #{tpu_custom_call.1} parent=1 // pred_fallthru
      _
    %362 = vsyncpa [#allocation3], 1

</llo_original>
